<compile_context>
chip_gen: v7x
topology: tpu7x:2x2x1
jax: 0.10.0
libtpu: 0.0.40
codegen_flags: <defaults>
</compile_context>

<pallas_src>
import jax
import jax.numpy as jnp
from jax.experimental import pallas as pl
from jax.experimental.pallas import tpu as pltpu


# ----------------------------- kernels ------------------------------------ #

def _encoder_core(v_ref, w1_ref, b1_ref, w2_ref, b2_ref, w3_ref, b3_ref):
    """Feature-major MLP encoder for one batch tile.  Returns (8, TB) f32."""
    v = v_ref[...]                                                  # (1, TB)
    # Linear(1,128): in_features == 1 -> VPU outer-product broadcast, no MXU.
    h1 = jnp.maximum(w1_ref[...] * v + b1_ref[...], 0.0)            # (128, TB)
    h2 = jnp.maximum(
        jnp.dot(w2_ref[...], h1, preferred_element_type=jnp.float32)
        + b2_ref[...], 0.0)                                         # (64, TB)
    return (jnp.dot(w3_ref[...], h2, preferred_element_type=jnp.float32)
            + b3_ref[...])                                          # (8, TB)


def _encoder_kernel(v_ref, w1, b1, w2, b2, w3, b3, e_ref):
    e_ref[...] = _encoder_core(v_ref, w1, b1, w2, b2, w3, b3)


def _encoder_w_kernel(v_ref, w1, b1, w2, b2, w3, b3, wt_ref, e_ref):
    e = _encoder_core(v_ref, w1, b1, w2, b2, w3, b3)                # (8, TB)
    # Fuse the bias-free W (8x8) transform for the v1 branch.
    e_ref[...] = jnp.dot(wt_ref[...], e, preferred_element_type=jnp.float32)


def _scores_kernel(e0_ref, f1_ref, s_ref):
    # (TM, 8) @ (8, TN) -> (TM, TN), lane-dense output tile.
    s_ref[...] = jnp.dot(e0_ref[...], f1_ref[...],
                         preferred_element_type=jnp.float32)


# ----------------------------- wrappers ------------------------------------ #

def _round_up(n, m):
    return ((n + m - 1) // m) * m


def _encode_fm(v, params, *, apply_w, tile_b=256):
    """v: (B, 1) f32 -> feature-major encodings (8, Bp); W applied if apply_w."""
    B = v.shape[0]
    Bp = _round_up(max(B, 1), tile_b)
    v_fm = jnp.pad(jnp.transpose(v).astype(jnp.float32), ((0, 0), (0, Bp - B)))

    w1, b1 = params["w1"], params["b1"]
    w2, b2 = params["w2"], params["b2"]
    w3, b3 = params["w3"], params["b3"]

    def const_spec(shape):
        # Constant block index -> weights stay resident in VMEM across the grid.
        return pl.BlockSpec(shape, lambda i: (0, 0))

    inputs = [v_fm, w1, b1, w2, b2, w3, b3]
    in_specs = [
        pl.BlockSpec((1, tile_b), lambda i: (0, i)),
        const_spec(w1.shape), const_spec(b1.shape),
        const_spec(w2.shape), const_spec(b2.shape),
        const_spec(w3.shape), const_spec(b3.shape),
    ]
    kernel = _encoder_kernel
    if apply_w:
        inputs.append(params["W"])
        in_specs.append(const_spec(params["W"].shape))
        kernel = _encoder_w_kernel

    n_weight_elems = sum(int(a.size) for a in inputs[1:])
    flops_per_elem = 2 * (1 * 128 + 128 * 64 + 64 * 8 + (8 * 8 if apply_w else 0))
    cost = pl.CostEstimate(
        flops=flops_per_elem * Bp,
        transcendentals=0,
        bytes_accessed=4 * (Bp + 8 * Bp + n_weight_elems))

    return pl.pallas_call(
        kernel,
        out_shape=jax.ShapeDtypeStruct((8, Bp), jnp.float32),
        grid=(Bp // tile_b,),
        in_specs=in_specs,
        out_specs=pl.BlockSpec((8, tile_b), lambda i: (0, i)),
        compiler_params=pltpu.CompilerParams(dimension_semantics=("parallel",)),
        cost_estimate=cost,
    )(*inputs)


def _scores(e0_bm, f1_fm, *, tile_m=256, tile_n=256):
    """e0_bm: (B0p, 8), f1_fm: (8, B1p) -> (B0p, B1p) scores."""
    B0p = e0_bm.shape[0]
    B1p = f1_fm.shape[1]
    cost = pl.CostEstimate(
        flops=2 * B0p * B1p * 8,
        transcendentals=0,
        bytes_accessed=4 * (B0p * 8 + 8 * B1p + B0p * B1p))
    return pl.pallas_call(
        _scores_kernel,
        out_shape=jax.ShapeDtypeStruct((B0p, B1p), jnp.float32),
        grid=(B0p // tile_m, B1p // tile_n),
        in_specs=[pl.BlockSpec((tile_m, 8), lambda i, j: (i, 0)),
                  pl.BlockSpec((8, tile_n), lambda i, j: (0, j))],
        out_specs=pl.BlockSpec((tile_m, tile_n), lambda i, j: (i, j)),
        compiler_params=pltpu.CompilerParams(
            dimension_semantics=("parallel", "parallel")),
        cost_estimate=cost,
    )(e0_bm, f1_fm)


def pred_separable_critic(v0, v1, params, *, tile_b=256):
    """v0: (B0, 1), v1: (B1, 1) float32 -> (B0, B1) scores = g(v0) h(v1)."""
    B0, B1 = v0.shape[0], v1.shape[0]
    e0_fm = _encode_fm(v0, params, apply_w=False, tile_b=tile_b)    # (8, B0p)
    f1_fm = _encode_fm(v1, params, apply_w=True, tile_b=tile_b)     # (8, B1p)
    e0_bm = jnp.transpose(e0_fm)          # tiny (8*B0p) XLA transpose, batch-major
    scores_p = _scores(e0_bm, f1_fm, tile_m=tile_b, tile_n=tile_b)  # (B0p, B1p)
    return scores_p[:B0, :B1]


# ----------------------------- params / reference -------------------------- #

def init_params(key):
    """PyTorch nn.Linear default init, weights stored (out, in), biases (out, 1)."""
    ks = jax.random.split(key, 7)

    def lin(kw, kb, fan_in, fan_out):
        bound = 1.0 / float(fan_in) ** 0.5
        w = jax.random.uniform(kw, (fan_out, fan_in), jnp.float32, -bound, bound)
        b = jax.random.uniform(kb, (fan_out, 1), jnp.float32, -bound, bound)
        return w, b

    w1, b1 = lin(ks[0], ks[1], 1, 128)
    w2, b2 = lin(ks[2], ks[3], 128, 64)
    w3, b3 = lin(ks[4], ks[5], 64, 8)
    bound_W = 1.0 / float(8) ** 0.5
    W = jax.random.uniform(ks[6], (8, 8), jnp.float32, -bound_W, bound_W)
    return {"w1": w1, "b1": b1, "w2": w2, "b2": b2, "w3": w3, "b3": b3, "W": W}


def _reference(v0, v1, p):
    def enc(v):
        h1 = jnp.maximum(v @ p["w1"].T + p["b1"][:, 0], 0.0)
        h2 = jnp.maximum(h1 @ p["w2"].T + p["b2"][:, 0], 0.0)
        return h2 @ p["w3"].T + p["b3"][:, 0]
    g = enc(v0)                      # (B0, 8)
    h = enc(v1) @ p["W"].T           # (B1, 8)
    return g @ h.T                   # (B0, B1)


# ----------------------------- test ----------------------------------------- #

if __name__ == "__main__":
    key = jax.random.PRNGKey(0)
    kp, k0, k1 = jax.random.split(key, 3)
    params = init_params(kp)

    B0, B1 = 12, 9                   # small, non-aligned batches (exercise padding)
    v0 = jax.random.normal(k0, (B0, 1), dtype=jnp.float32)
    v1 = jax.random.normal(k1, (B1, 1), dtype=jnp.float32)

    out = pred_separable_critic(v0, v1, params)
    out = jax.block_until_ready(out)

    ref = _reference(v0, v1, params)
    assert out.shape == (B0, B1), out.shape
    assert jnp.allclose(out, ref, atol=1e-3, rtol=1e-3), \
        f"max abs diff = {float(jnp.max(jnp.abs(out - ref)))}"

    print("KERNEL_OK")
</pallas_src>

<mosaic_0001>
module attributes {stable_mosaic.version = 11 : i64} {
  func.func @_encoder_kernel(%arg0: i32, %arg1: memref<1x256xf32, #tpu.memory_space<vmem>>, %arg2: memref<128x1xf32, #tpu.memory_space<vmem>>, %arg3: memref<128x1xf32, #tpu.memory_space<vmem>>, %arg4: memref<64x128xf32, #tpu.memory_space<vmem>>, %arg5: memref<64x1xf32, #tpu.memory_space<vmem>>, %arg6: memref<8x64xf32, #tpu.memory_space<vmem>>, %arg7: memref<8x1xf32, #tpu.memory_space<vmem>>, %arg8: memref<8x256xf32, #tpu.memory_space<vmem>>) attributes {dimension_semantics = [#tpu.dimension_semantics<parallel>], iteration_bounds = array<i64: 1>, scalar_prefetch = 0 : i64, scratch_operands = 0 : i64, tpu.core_type = #tpu.core_type<tc>, window_params = [{transform_indices = @transform_0, window_bounds = array<i64: 1, 256>}, {pipeline_mode = #tpu.pipeline_mode<synchronous>, transform_indices = @transform_1, window_bounds = array<i64: 128, 1>}, {pipeline_mode = #tpu.pipeline_mode<synchronous>, transform_indices = @transform_2, window_bounds = array<i64: 128, 1>}, {pipeline_mode = #tpu.pipeline_mode<synchronous>, transform_indices = @transform_3, window_bounds = array<i64: 64, 128>}, {pipeline_mode = #tpu.pipeline_mode<synchronous>, transform_indices = @transform_4, window_bounds = array<i64: 64, 1>}, {pipeline_mode = #tpu.pipeline_mode<synchronous>, transform_indices = @transform_5, window_bounds = array<i64: 8, 64>}, {pipeline_mode = #tpu.pipeline_mode<synchronous>, transform_indices = @transform_6, window_bounds = array<i64: 8, 1>}, {transform_indices = @transform_7, window_bounds = array<i64: 8, 256>}]} {
    %c0 = arith.constant 0 : index
    %c0_0 = arith.constant 0 : index
    %0 = vector.load %arg1[%c0, %c0_0] : memref<1x256xf32, #tpu.memory_space<vmem>>, vector<1x256xf32>
    %c0_1 = arith.constant 0 : index
    %c0_2 = arith.constant 0 : index
    %1 = vector.load %arg2[%c0_1, %c0_2] : memref<128x1xf32, #tpu.memory_space<vmem>>, vector<128x1xf32>
    %2 = vector.broadcast %1 : vector<128x1xf32> to vector<128x256xf32>
    %3 = vector.broadcast %0 : vector<1x256xf32> to vector<128x256xf32>
    %4 = arith.mulf %2, %3 : vector<128x256xf32>
    %c0_3 = arith.constant 0 : index
    %c0_4 = arith.constant 0 : index
    %5 = vector.load %arg3[%c0_3, %c0_4] : memref<128x1xf32, #tpu.memory_space<vmem>>, vector<128x1xf32>
    %6 = vector.broadcast %5 : vector<128x1xf32> to vector<128x256xf32>
    %7 = arith.addf %4, %6 : vector<128x256xf32>
    %cst = arith.constant 0.000000e+00 : f32
    %8 = vector.broadcast %cst : f32 to vector<128x256xf32>
    %9 = arith.maximumf %7, %8 : vector<128x256xf32>
    %c0_5 = arith.constant 0 : index
    %c0_6 = arith.constant 0 : index
    %10 = vector.load %arg4[%c0_5, %c0_6] : memref<64x128xf32, #tpu.memory_space<vmem>>, vector<64x128xf32>
    %cst_7 = arith.constant dense<0.000000e+00> : vector<64x256xf32>
    %11 = tpu.matmul %10, %9, %cst_7 {dimension_numbers = #tpu.dot_dimension_numbers<[1], [0], [0], [1], [0, 0, 1, 1], [], []>} : vector<64x128xf32>, vector<128x256xf32>, vector<64x256xf32> -> vector<64x256xf32>
    %c0_8 = arith.constant 0 : index
    %c0_9 = arith.constant 0 : index
    %12 = vector.load %arg5[%c0_8, %c0_9] : memref<64x1xf32, #tpu.memory_space<vmem>>, vector<64x1xf32>
    %13 = vector.broadcast %12 : vector<64x1xf32> to vector<64x256xf32>
    %14 = arith.addf %11, %13 : vector<64x256xf32>
    %cst_10 = arith.constant 0.000000e+00 : f32
    %15 = vector.broadcast %cst_10 : f32 to vector<64x256xf32>
    %16 = arith.maximumf %14, %15 : vector<64x256xf32>
    %c0_11 = arith.constant 0 : index
    %c0_12 = arith.constant 0 : index
    %17 = vector.load %arg6[%c0_11, %c0_12] : memref<8x64xf32, #tpu.memory_space<vmem>>, vector<8x64xf32>
    %cst_13 = arith.constant dense<0.000000e+00> : vector<8x256xf32>
    %18 = tpu.matmul %17, %16, %cst_13 {dimension_numbers = #tpu.dot_dimension_numbers<[1], [0], [0], [1], [0, 0, 1, 1], [], []>} : vector<8x64xf32>, vector<64x256xf32>, vector<8x256xf32> -> vector<8x256xf32>
    %c0_14 = arith.constant 0 : index
    %c0_15 = arith.constant 0 : index
    %19 = vector.load %arg7[%c0_14, %c0_15] : memref<8x1xf32, #tpu.memory_space<vmem>>, vector<8x1xf32>
    %20 = vector.broadcast %19 : vector<8x1xf32> to vector<8x256xf32>
    %21 = arith.addf %18, %20 : vector<8x256xf32>
    %c0_16 = arith.constant 0 : index
    %c0_17 = arith.constant 0 : index
    %22 = vector.load %arg8[%c0_16, %c0_17] : memref<8x256xf32, #tpu.memory_space<vmem>>, vector<8x256xf32>
    tpu.vector_store %arg8[%c0_16, %c0_17], %21 {strides = array<i32>} : memref<8x256xf32, #tpu.memory_space<vmem>>, vector<8x256xf32>,
    return
  }
  func.func @transform_0(%arg0: i32) -> (i32, i32) {
    %c0_i32 = arith.constant 0 : i32
    %c0_i32_0 = arith.constant 0 : i32
    return %c0_i32, %arg0 : i32, i32
  }
  func.func @transform_1(%arg0: i32) -> (i32, i32) {
    %c0_i32 = arith.constant 0 : i32
    %c0_i32_0 = arith.constant 0 : i32
    %c0_i32_1 = arith.constant 0 : i32
    return %c0_i32, %c0_i32_0 : i32, i32
  }
  func.func @transform_2(%arg0: i32) -> (i32, i32) {
    %c0_i32 = arith.constant 0 : i32
    %c0_i32_0 = arith.constant 0 : i32
    %c0_i32_1 = arith.constant 0 : i32
    return %c0_i32, %c0_i32_0 : i32, i32
  }
  func.func @transform_3(%arg0: i32) -> (i32, i32) {
    %c0_i32 = arith.constant 0 : i32
    %c0_i32_0 = arith.constant 0 : i32
    %c0_i32_1 = arith.constant 0 : i32
    return %c0_i32, %c0_i32_0 : i32, i32
  }
  func.func @transform_4(%arg0: i32) -> (i32, i32) {
    %c0_i32 = arith.constant 0 : i32
    %c0_i32_0 = arith.constant 0 : i32
    %c0_i32_1 = arith.constant 0 : i32
    return %c0_i32, %c0_i32_0 : i32, i32
  }
  func.func @transform_5(%arg0: i32) -> (i32, i32) {
    %c0_i32 = arith.constant 0 : i32
    %c0_i32_0 = arith.constant 0 : i32
    %c0_i32_1 = arith.constant 0 : i32
    return %c0_i32, %c0_i32_0 : i32, i32
  }
  func.func @transform_6(%arg0: i32) -> (i32, i32) {
    %c0_i32 = arith.constant 0 : i32
    %c0_i32_0 = arith.constant 0 : i32
    %c0_i32_1 = arith.constant 0 : i32
    return %c0_i32, %c0_i32_0 : i32, i32
  }
  func.func @transform_7(%arg0: i32) -> (i32, i32) {
    %c0_i32 = arith.constant 0 : i32
    %c0_i32_0 = arith.constant 0 : i32
    return %c0_i32, %arg0 : i32, i32
  }
}

</mosaic_0001>

<llo_original>
// kernel: tpu_custom_call.1
$region0: #{tpu_custom_call.1}
  #allocation0 [shape = 'u32[]', space=smem, size = 0x4, offset = 0x4, fixed_abs, tag = 'smem constant byte address 0x4 - core index']
  #allocation1 [shape = 'u32[144,128]{1,0:T(1,128)}', space=vmem, size = 0x12000, scoped, tag = 'internal scratch']
  %s0 = inlined_call_operand.vmem [shape: f32[1,256], index: 0, kind: input, shape index: {}]
  %s1 = inlined_call_operand.vmem [shape: f32[128,1], index: 1, kind: input, shape index: {}]
  %s2 = inlined_call_operand.vmem [shape: f32[128,1], index: 2, kind: input, shape index: {}]
  %s3 = inlined_call_operand.vmem [shape: f32[64,128], index: 3, kind: input, shape index: {}]
  %s4 = inlined_call_operand.vmem [shape: f32[64,1], index: 4, kind: input, shape index: {}]
  %s5 = inlined_call_operand.vmem [shape: f32[8,64], index: 5, kind: input, shape index: {}]
  %s6 = inlined_call_operand.vmem [shape: f32[8,1], index: 6, kind: input, shape index: {}]
  %s7 = inlined_call_operand.hbm [shape: f32[8,256], index: 7, kind: output, shape index: {}]
  %s8 = sld [smem:[#allocation0]]
  $region38: #{tpu_custom_call.1} parent=0
    _
  %s10 = ssub.s32 1, %s8
  %s11 = scalar_select 0, %s10, %s8
  $region1: #{tpu_custom_call.1} parent=0
    #allocation2 [shape = 'u8[8192]{0}', space=vmem, size = 0x2000, scoped, tag = 'output window, operand 0, single buffered']
    #allocation3 [shape = 's32[1]{0}', space=sflag, size = 0x4, scoped, tag = 'scoped memory for tpu_custom_call.1']
    %12 = vsyncpa [#allocation3], 0
    // Predicated region
    $region2: #{tpu_custom_call.1} parent=1 // pred_check
      _
    $region3: #{tpu_custom_call.1} parent=1 // pred_check_branch
      %14 = sbr.rel (0) target = $region5
    $region4: #{tpu_custom_call.1} parent=1 // pred_region
      _
    $region5: #{tpu_custom_call.1} parent=1 // pred_fallthru
      _
    // Predicated region
    $region6: #{tpu_custom_call.1} parent=1 // pred_check
      _
    $region7: #{tpu_custom_call.1} parent=1 // pred_check_branch
      %16 = sbr.rel (0) target = $region9
    $region8: #{tpu_custom_call.1} parent=1 // pred_region
      _
    $region9: #{tpu_custom_call.1} parent=1 // pred_fallthru
      _
    // Predicated region
    $region10: #{tpu_custom_call.1} parent=1 // pred_check
      _
    $region11: #{tpu_custom_call.1} parent=1 // pred_check_branch
      %18 = sbr.rel (0) target = $region13
    $region12: #{tpu_custom_call.1} parent=1 // pred_region
      _
    $region13: #{tpu_custom_call.1} parent=1 // pred_fallthru
      _
    // Predicated region
    $region14: #{tpu_custom_call.1} parent=1 // pred_check
      _
    $region15: #{tpu_custom_call.1} parent=1 // pred_check_branch
      %20 = sbr.rel (0) target = $region17
    $region16: #{tpu_custom_call.1} parent=1 // pred_region
      _
    $region17: #{tpu_custom_call.1} parent=1 // pred_fallthru
      _
    // Predicated region
    $region18: #{tpu_custom_call.1} parent=1 // pred_check
      _
    $region19: #{tpu_custom_call.1} parent=1 // pred_check_branch
      %22 = sbr.rel (0) target = $region21
    $region20: #{tpu_custom_call.1} parent=1 // pred_region
      _
    $region21: #{tpu_custom_call.1} parent=1 // pred_fallthru
      _
    // Predicated region
    $region22: #{tpu_custom_call.1} parent=1 // pred_check
      _
    $region23: #{tpu_custom_call.1} parent=1 // pred_check_branch
      %24 = sbr.rel (0) target = $region25
    $region24: #{tpu_custom_call.1} parent=1 // pred_region
      _
    $region25: #{tpu_custom_call.1} parent=1 // pred_fallthru
      _
    // Predicated region
    $region26: #{tpu_custom_call.1} parent=1 // pred_check
      _
    $region27: #{tpu_custom_call.1} parent=1 // pred_check_branch
      %26 = sbr.rel (0) target = $region29
    $region28: #{tpu_custom_call.1} parent=1 // pred_region
      _
    $region29: #{tpu_custom_call.1} parent=1 // pred_fallthru
      _
    %v27 = vld [vmem:[%s0] sm:$0x3]
    %v28 = vld [vmem:[%s1] sm:$0xff]
    %v29 = vld [vmem:[%s1 + $0x8] sm:$0xff]
    %v30 = vld [vmem:[%s1 + $0x10] sm:$0xff]
    %v31 = vld [vmem:[%s1 + $0x18] sm:$0xff]
    %v32 = vld [vmem:[%s1 + $0x20] sm:$0xff]
    %v33 = vld [vmem:[%s1 + $0x28] sm:$0xff]
    %v34 = vld [vmem:[%s1 + $0x30] sm:$0xff]
    %v35 = vld [vmem:[%s1 + $0x38] sm:$0xff]
    %v36 = vld [vmem:[%s1 + $0x40] sm:$0xff]
    %v37 = vld [vmem:[%s1 + $0x48] sm:$0xff]
    %v38 = vld [vmem:[%s1 + $0x50] sm:$0xff]
    %v39 = vld [vmem:[%s1 + $0x58] sm:$0xff]
    %v40 = vld [vmem:[%s1 + $0x60] sm:$0xff]
    %v41 = vld [vmem:[%s1 + $0x68] sm:$0xff]
    %v42 = vld [vmem:[%s1 + $0x70] sm:$0xff]
    %v43 = vld [vmem:[%s1 + $0x78] sm:$0xff]
    %45 = vset.pattern.permute.xlu0 0
    %46 = vperm.xlu0 %45, %v28
    %v47 = vpop.permute.xlu0 %46
    %50 = vset.pattern.permute.xlu0 0
    %51 = vperm.xlu0 %50, %v29
    %v52 = vpop.permute.xlu0 %51
    %55 = vset.pattern.permute.xlu0 0
    %56 = vperm.xlu0 %55, %v30
    %v57 = vpop.permute.xlu0 %56
    %60 = vset.pattern.permute.xlu0 0
    %61 = vperm.xlu0 %60, %v31
    %v62 = vpop.permute.xlu0 %61
    %65 = vset.pattern.permute.xlu0 0
    %66 = vperm.xlu0 %65, %v32
    %v67 = vpop.permute.xlu0 %66
    %70 = vset.pattern.permute.xlu0 0
    %71 = vperm.xlu0 %70, %v33
    %v72 = vpop.permute.xlu0 %71
    %75 = vset.pattern.permute.xlu0 0
    %76 = vperm.xlu0 %75, %v34
    %v77 = vpop.permute.xlu0 %76
    %80 = vset.pattern.permute.xlu0 0
    %81 = vperm.xlu0 %80, %v35
    %v82 = vpop.permute.xlu0 %81
    %85 = vset.pattern.permute.xlu0 0
    %86 = vperm.xlu0 %85, %v36
    %v87 = vpop.permute.xlu0 %86
    %90 = vset.pattern.permute.xlu0 0
    %91 = vperm.xlu0 %90, %v37
    %v92 = vpop.permute.xlu0 %91
    %95 = vset.pattern.permute.xlu0 0
    %96 = vperm.xlu0 %95, %v38
    %v97 = vpop.permute.xlu0 %96
    %100 = vset.pattern.permute.xlu0 0
    %101 = vperm.xlu0 %100, %v39
    %v102 = vpop.permute.xlu0 %101
    %105 = vset.pattern.permute.xlu0 0
    %106 = vperm.xlu0 %105, %v40
    %v107 = vpop.permute.xlu0 %106
    %110 = vset.pattern.permute.xlu0 0
    %111 = vperm.xlu0 %110, %v41
    %v112 = vpop.permute.xlu0 %111
    %115 = vset.pattern.permute.xlu0 0
    %116 = vperm.xlu0 %115, %v42
    %v117 = vpop.permute.xlu0 %116
    %120 = vset.pattern.permute.xlu0 0
    %121 = vperm.xlu0 %120, %v43
    %v122 = vpop.permute.xlu0 %121
    %v125 = vlaneseq
    %v126 = vshrl.u32 %v125, 7
    %v127 = vsub.s32 0, %v126
    %v128 = vrot.slane %v27, %v127
    %v129 = vlaneseq
    %v130 = vshrl.u32 %v129, 7
    %v131 = vsub.s32 1, %v130
    %v132 = vrot.slane %v27, %v131
    %v135 = vmul.f32 %v47, %v128
    %v136 = vmul.f32 %v47, %v132
    %v137 = vmul.f32 %v52, %v128
    %v138 = vmul.f32 %v52, %v132
    %v139 = vmul.f32 %v57, %v128
    %v140 = vmul.f32 %v57, %v132
    %v141 = vmul.f32 %v62, %v128
    %v142 = vmul.f32 %v62, %v132
    %v143 = vmul.f32 %v67, %v128
    %v144 = vmul.f32 %v67, %v132
    %v145 = vmul.f32 %v72, %v128
    %v146 = vmul.f32 %v72, %v132
    %v147 = vmul.f32 %v77, %v128
    %v148 = vmul.f32 %v77, %v132
    %v149 = vmul.f32 %v82, %v128
    %v150 = vmul.f32 %v82, %v132
    %v151 = vmul.f32 %v87, %v128
    %v152 = vmul.f32 %v87, %v132
    %v153 = vmul.f32 %v92, %v128
    %v154 = vmul.f32 %v92, %v132
    %v155 = vmul.f32 %v97, %v128
    %v156 = vmul.f32 %v97, %v132
    %v157 = vmul.f32 %v102, %v128
    %v158 = vmul.f32 %v102, %v132
    %v159 = vmul.f32 %v107, %v128
    %v160 = vmul.f32 %v107, %v132
    %v161 = vmul.f32 %v112, %v128
    %v162 = vmul.f32 %v112, %v132
    %v163 = vmul.f32 %v117, %v128
    %v164 = vmul.f32 %v117, %v132
    %v165 = vmul.f32 %v122, %v128
    %v166 = vmul.f32 %v122, %v132
    %v167 = vld [vmem:[%s2] sm:$0xff]
    %v168 = vld [vmem:[%s2 + $0x8] sm:$0xff]
    %v169 = vld [vmem:[%s2 + $0x10] sm:$0xff]
    %v170 = vld [vmem:[%s2 + $0x18] sm:$0xff]
    %v171 = vld [vmem:[%s2 + $0x20] sm:$0xff]
    %v172 = vld [vmem:[%s2 + $0x28] sm:$0xff]
    %v173 = vld [vmem:[%s2 + $0x30] sm:$0xff]
    %v174 = vld [vmem:[%s2 + $0x38] sm:$0xff]
    %v175 = vld [vmem:[%s2 + $0x40] sm:$0xff]
    %v176 = vld [vmem:[%s2 + $0x48] sm:$0xff]
    %v177 = vld [vmem:[%s2 + $0x50] sm:$0xff]
    %v178 = vld [vmem:[%s2 + $0x58] sm:$0xff]
    %v179 = vld [vmem:[%s2 + $0x60] sm:$0xff]
    %v180 = vld [vmem:[%s2 + $0x68] sm:$0xff]
    %v181 = vld [vmem:[%s2 + $0x70] sm:$0xff]
    %v182 = vld [vmem:[%s2 + $0x78] sm:$0xff]
    %184 = vset.pattern.permute.xlu0 0
    %185 = vperm.xlu0 %184, %v167
    %v186 = vpop.permute.xlu0 %185
    %189 = vset.pattern.permute.xlu0 0
    %190 = vperm.xlu0 %189, %v168
    %v191 = vpop.permute.xlu0 %190
    %194 = vset.pattern.permute.xlu0 0
    %195 = vperm.xlu0 %194, %v169
    %v196 = vpop.permute.xlu0 %195
    %199 = vset.pattern.permute.xlu0 0
    %200 = vperm.xlu0 %199, %v170
    %v201 = vpop.permute.xlu0 %200
    %204 = vset.pattern.permute.xlu0 0
    %205 = vperm.xlu0 %204, %v171
    %v206 = vpop.permute.xlu0 %205
    %209 = vset.pattern.permute.xlu0 0
    %210 = vperm.xlu0 %209, %v172
    %v211 = vpop.permute.xlu0 %210
    %214 = vset.pattern.permute.xlu0 0
    %215 = vperm.xlu0 %214, %v173
    %v216 = vpop.permute.xlu0 %215
    %219 = vset.pattern.permute.xlu0 0
    %220 = vperm.xlu0 %219, %v174
    %v221 = vpop.permute.xlu0 %220
    %224 = vset.pattern.permute.xlu0 0
    %225 = vperm.xlu0 %224, %v175
    %v226 = vpop.permute.xlu0 %225
    %229 = vset.pattern.permute.xlu0 0
    %230 = vperm.xlu0 %229, %v176
    %v231 = vpop.permute.xlu0 %230
    %234 = vset.pattern.permute.xlu0 0
    %235 = vperm.xlu0 %234, %v177
    %v236 = vpop.permute.xlu0 %235
    %239 = vset.pattern.permute.xlu0 0
    %240 = vperm.xlu0 %239, %v178
    %v241 = vpop.permute.xlu0 %240
    %244 = vset.pattern.permute.xlu0 0
    %245 = vperm.xlu0 %244, %v179
    %v246 = vpop.permute.xlu0 %245
    %249 = vset.pattern.permute.xlu0 0
    %250 = vperm.xlu0 %249, %v180
    %v251 = vpop.permute.xlu0 %250
    %254 = vset.pattern.permute.xlu0 0
    %255 = vperm.xlu0 %254, %v181
    %v256 = vpop.permute.xlu0 %255
    %259 = vset.pattern.permute.xlu0 0
    %260 = vperm.xlu0 %259, %v182
    %v261 = vpop.permute.xlu0 %260
    %v263 = vadd.f32 %v135, %v186
    %v264 = vadd.f32 %v136, %v186
    %v265 = vadd.f32 %v137, %v191
    %v266 = vadd.f32 %v138, %v191
    %v267 = vadd.f32 %v139, %v196
    %v268 = vadd.f32 %v140, %v196
    %v269 = vadd.f32 %v141, %v201
    %v270 = vadd.f32 %v142, %v201
    %v271 = vadd.f32 %v143, %v206
    %v272 = vadd.f32 %v144, %v206
    %v273 = vadd.f32 %v145, %v211
    %v274 = vadd.f32 %v146, %v211
    %v275 = vadd.f32 %v147, %v216
    %v276 = vadd.f32 %v148, %v216
    %v277 = vadd.f32 %v149, %v221
    %v278 = vadd.f32 %v150, %v221
    %v279 = vadd.f32 %v151, %v226
    %v280 = vadd.f32 %v152, %v226
    %v281 = vadd.f32 %v153, %v231
    %v282 = vadd.f32 %v154, %v231
    %v283 = vadd.f32 %v155, %v236
    %v284 = vadd.f32 %v156, %v236
    %v285 = vadd.f32 %v157, %v241
    %v286 = vadd.f32 %v158, %v241
    %v287 = vadd.f32 %v159, %v246
    %v288 = vadd.f32 %v160, %v246
    %v289 = vadd.f32 %v161, %v251
    %v290 = vadd.f32 %v162, %v251
    %v291 = vadd.f32 %v163, %v256
    %v292 = vadd.f32 %v164, %v256
    %v293 = vadd.f32 %v165, %v261
    %v294 = vadd.f32 %v166, %v261
    %v295 = vmax.f32 %v263, 0.0
    %v296 = vmax.f32 %v264, 0.0
    %v297 = vmax.f32 %v265, 0.0
    %v298 = vmax.f32 %v266, 0.0
    %v299 = vmax.f32 %v267, 0.0
    %v300 = vmax.f32 %v268, 0.0
    %v301 = vmax.f32 %v269, 0.0
    %v302 = vmax.f32 %v270, 0.0
    %v303 = vmax.f32 %v271, 0.0
    %v304 = vmax.f32 %v272, 0.0
    %v305 = vmax.f32 %v273, 0.0
    %v306 = vmax.f32 %v274, 0.0
    %v307 = vmax.f32 %v275, 0.0
    %v308 = vmax.f32 %v276, 0.0
    %v309 = vmax.f32 %v277, 0.0
    %v310 = vmax.f32 %v278, 0.0
    %v311 = vmax.f32 %v279, 0.0
    %v312 = vmax.f32 %v280, 0.0
    %v313 = vmax.f32 %v281, 0.0
    %v314 = vmax.f32 %v282, 0.0
    %v315 = vmax.f32 %v283, 0.0
    %v316 = vmax.f32 %v284, 0.0
    %v317 = vmax.f32 %v285, 0.0
    %v318 = vmax.f32 %v286, 0.0
    %v319 = vmax.f32 %v287, 0.0
    %v320 = vmax.f32 %v288, 0.0
    %v321 = vmax.f32 %v289, 0.0
    %v322 = vmax.f32 %v290, 0.0
    %v323 = vmax.f32 %v291, 0.0
    %v324 = vmax.f32 %v292, 0.0
    %v325 = vmax.f32 %v293, 0.0
    %v326 = vmax.f32 %v294, 0.0
    %v327 = vld [vmem:[%s3] sm:$0xff]
    %v328 = vld [vmem:[%s3 + $0x8] sm:$0xff]
    %v329 = vld [vmem:[%s3 + $0x10] sm:$0xff]
    %v330 = vld [vmem:[%s3 + $0x18] sm:$0xff]
    %v331 = vld [vmem:[%s3 + $0x20] sm:$0xff]
    %v332 = vld [vmem:[%s3 + $0x28] sm:$0xff]
    %v333 = vld [vmem:[%s3 + $0x30] sm:$0xff]
    %v334 = vld [vmem:[%s3 + $0x38] sm:$0xff]
    %v335 = vld [vmem:[%s4] sm:$0xff]
    %v336 = vld [vmem:[%s4 + $0x8] sm:$0xff]
    %v337 = vld [vmem:[%s4 + $0x10] sm:$0xff]
    %v338 = vld [vmem:[%s4 + $0x18] sm:$0xff]
    %v339 = vld [vmem:[%s4 + $0x20] sm:$0xff]
    %v340 = vld [vmem:[%s4 + $0x28] sm:$0xff]
    %v341 = vld [vmem:[%s4 + $0x30] sm:$0xff]
    %v342 = vld [vmem:[%s4 + $0x38] sm:$0xff]
    %344 = vset.pattern.permute.xlu0 0
    %345 = vperm.xlu0 %344, %v335
    %v346 = vpop.permute.xlu0 %345
    %349 = vset.pattern.permute.xlu0 0
    %350 = vperm.xlu0 %349, %v336
    %v351 = vpop.permute.xlu0 %350
    %354 = vset.pattern.permute.xlu0 0
    %355 = vperm.xlu0 %354, %v337
    %v356 = vpop.permute.xlu0 %355
    %359 = vset.pattern.permute.xlu0 0
    %360 = vperm.xlu0 %359, %v338
    %v361 = vpop.permute.xlu0 %360
    %364 = vset.pattern.permute.xlu0 0
    %365 = vperm.xlu0 %364, %v339
    %v366 = vpop.permute.xlu0 %365
    %369 = vset.pattern.permute.xlu0 0
    %370 = vperm.xlu0 %369, %v340
    %v371 = vpop.permute.xlu0 %370
    %374 = vset.pattern.permute.xlu0 0
    %375 = vperm.xlu0 %374, %v341
    %v376 = vpop.permute.xlu0 %375
    %379 = vset.pattern.permute.xlu0 0
    %380 = vperm.xlu0 %379, %v342
    %v381 = vpop.permute.xlu0 %380
    %383 = vmatprep.subr.mxu0 %v296
    %384 = vmatpush1.msra.mxu0 %v295
    %385 = vmatprep.subr.mxu0 %v298
    %386 = vmatpush1.msra.mxu0 %v297
    %387 = vmatprep.subr.mxu0 %v300
    %388 = vmatpush1.msra.mxu0 %v299
    %389 = vmatprep.subr.mxu0 %v302
    %390 = vmatpush1.msra.mxu0 %v301
    %391 = vmatprep.subr.mxu0 %v304
    %392 = vmatpush1.msra.mxu0 %v303
    %393 = vmatprep.subr.mxu0 %v306
    %394 = vmatpush1.msra.mxu0 %v305
    %395 = vmatprep.subr.mxu0 %v308
    %396 = vmatpush1.msra.mxu0 %v307
    %397 = vmatprep.subr.mxu0 %v310
    %398 = vmatpush1.msra.mxu0 %v309
    %399 = vmatprep.subr.mxu0 %v312
    %400 = vmatpush1.msra.mxu0 %v311
    %401 = vmatprep.subr.mxu0 %v314
    %402 = vmatpush1.msra.mxu0 %v313
    %403 = vmatprep.subr.mxu0 %v316
    %404 = vmatpush1.msra.mxu0 %v315
    %405 = vmatprep.subr.mxu0 %v318
    %406 = vmatpush1.msra.mxu0 %v317
    %407 = vmatprep.subr.mxu0 %v320
    %408 = vmatpush1.msra.mxu0 %v319
    %409 = vmatprep.subr.mxu0 %v322
    %410 = vmatpush1.msra.mxu0 %v321
    %411 = vmatprep.subr.mxu0 %v324
    %412 = vmatpush1.msra.mxu0 %v323
    %413 = vmatprep.subr.mxu0 %v326
    %414 = vmatpush1.msra.mxu0 %v325
    %415 = vmatprep.subr.mxu0 0.0
    %416 = vmatpush1.msra.mxu0 0.0
    %417 = vmatprep.subr.mxu0 0.0
    %418 = vmatpush1.msra.mxu0 0.0
    %419 = vmatprep.subr.mxu0 0.0
    %420 = vmatpush1.msra.mxu0 0.0
    %421 = vmatprep.subr.mxu0 0.0
    %422 = vmatpush1.msra.mxu0 0.0
    %423 = vmatprep.subr.mxu0 0.0
    %424 = vmatpush1.msra.mxu0 0.0
    %425 = vmatprep.subr.mxu0 0.0
    %426 = vmatpush1.msra.mxu0 0.0
    %427 = vmatprep.subr.mxu0 0.0
    %428 = vmatpush1.msra.mxu0 0.0
    %429 = vmatprep.subr.mxu0 0.0
    %430 = vmatpush1.msra.mxu0 0.0
    %431 = vmatprep.subr.mxu0 0.0
    %432 = vmatpush1.msra.mxu0 0.0
    %433 = vmatprep.subr.mxu0 0.0
    %434 = vmatpush1.msra.mxu0 0.0
    %435 = vmatprep.subr.mxu0 0.0
    %436 = vmatpush1.msra.mxu0 0.0
    %437 = vmatprep.subr.mxu0 0.0
    %438 = vmatpush1.msra.mxu0 0.0
    %439 = vmatprep.subr.mxu0 0.0
    %440 = vmatpush1.msra.mxu0 0.0
    %441 = vmatprep.subr.mxu0 0.0
    %442 = vmatpush1.msra.mxu0 0.0
    %443 = vmatprep.subr.mxu0 0.0
    %444 = vmatpush1.msra.mxu0 0.0
    %445 = vmatprep.subr.mxu0 0.0
    %446 = vmatpush1.msra.mxu0 0.0
    %447 = vmatprep.mubr.f32.mxu0 0.0
    %448 = vmatmul.mubr.f32.gmra.mrb[0].mxu0 %v327
    %v449 = vpop.f32.mrb[0].mxu0
    %v450 = vadd.f32 %v346, %v449
    %v451 = vpop.f32.mrb[0].mxu0
    %v452 = vadd.f32 %v346, %v451
    %453 = vmatprep.mubr.f32.mxu0 0.0
    %454 = vmatmul.mubr.f32.gmra.mrb[0].mxu0 %v328
    %v455 = vpop.f32.mrb[0].mxu0
    %v456 = vadd.f32 %v351, %v455
    %v457 = vpop.f32.mrb[0].mxu0
    %v458 = vadd.f32 %v351, %v457
    %459 = vmatprep.mubr.f32.mxu0 0.0
    %460 = vmatmul.mubr.f32.gmra.mrb[0].mxu0 %v329
    %v461 = vpop.f32.mrb[0].mxu0
    %v462 = vadd.f32 %v356, %v461
    %v463 = vpop.f32.mrb[0].mxu0
    %v464 = vadd.f32 %v356, %v463
    %465 = vmatprep.mubr.f32.mxu0 0.0
    %466 = vmatmul.mubr.f32.gmra.mrb[0].mxu0 %v330
    %v467 = vpop.f32.mrb[0].mxu0
    %v468 = vadd.f32 %v361, %v467
    %v469 = vpop.f32.mrb[0].mxu0
    %v470 = vadd.f32 %v361, %v469
    %471 = vmatprep.mubr.f32.mxu0 0.0
    %472 = vmatmul.mubr.f32.gmra.mrb[0].mxu0 %v331
    %v473 = vpop.f32.mrb[0].mxu0
    %v474 = vadd.f32 %v366, %v473
    %v475 = vpop.f32.mrb[0].mxu0
    %v476 = vadd.f32 %v366, %v475
    %477 = vmatprep.mubr.f32.mxu0 0.0
    %478 = vmatmul.mubr.f32.gmra.mrb[0].mxu0 %v332
    %v479 = vpop.f32.mrb[0].mxu0
    %v480 = vadd.f32 %v371, %v479
    %v481 = vpop.f32.mrb[0].mxu0
    %v482 = vadd.f32 %v371, %v481
    %483 = vmatprep.mubr.f32.mxu0 0.0
    %484 = vmatmul.mubr.f32.gmra.mrb[0].mxu0 %v333
    %v485 = vpop.f32.mrb[0].mxu0
    %v486 = vadd.f32 %v376, %v485
    %v487 = vpop.f32.mrb[0].mxu0
    %v488 = vadd.f32 %v376, %v487
    %489 = vmatprep.mubr.f32.mxu0 0.0
    %490 = vmatmul.mubr.f32.gmra.mrb[0].mxu0 %v334
    %v491 = vpop.f32.mrb[0].mxu0
    %v492 = vadd.f32 %v381, %v491
    %v493 = vpop.f32.mrb[0].mxu0
    %v494 = vadd.f32 %v381, %v493
    %495 = vdwg.mxu0
    %v496 = vmax.f32 %v450, 0.0
    %v497 = vmax.f32 %v452, 0.0
    %v498 = vmax.f32 %v456, 0.0
    %v499 = vmax.f32 %v458, 0.0
    %v500 = vmax.f32 %v462, 0.0
    %v501 = vmax.f32 %v464, 0.0
    %v502 = vmax.f32 %v468, 0.0
    %v503 = vmax.f32 %v470, 0.0
    %v504 = vmax.f32 %v474, 0.0
    %v505 = vmax.f32 %v476, 0.0
    %v506 = vmax.f32 %v480, 0.0
    %v507 = vmax.f32 %v482, 0.0
    %v508 = vmax.f32 %v486, 0.0
    %v509 = vmax.f32 %v488, 0.0
    %v510 = vmax.f32 %v492, 0.0
    %v511 = vmax.f32 %v494, 0.0
    %v512 = vld [vmem:[%s5] sm:$0xff]
    %v513 = vld [vmem:[%s6] sm:$0xff]
    %515 = vset.pattern.permute.xlu0 0
    %516 = vperm.xlu0 %515, %v513
    %v517 = vpop.permute.xlu0 %516
    %vm519 = vcmask 523264
    %v521 = vsel %vm519, %v512, 0
    %523 = vmatprep.subr.mxu0 %v497
    %524 = vmatpush1.msra.mxu0 %v496
    %525 = vmatprep.subr.mxu0 %v499
    %526 = vmatpush1.msra.mxu0 %v498
    %527 = vmatprep.subr.mxu0 %v501
    %528 = vmatpush1.msra.mxu0 %v500
    %529 = vmatprep.subr.mxu0 %v503
    %530 = vmatpush1.msra.mxu0 %v502
    %531 = vmatprep.subr.mxu0 %v505
    %532 = vmatpush1.msra.mxu0 %v504
    %533 = vmatprep.subr.mxu0 %v507
    %534 = vmatpush1.msra.mxu0 %v506
    %535 = vmatprep.subr.mxu0 %v509
    %536 = vmatpush1.msra.mxu0 %v508
    %537 = vmatprep.subr.mxu0 %v511
    %538 = vmatpush1.msra.mxu0 %v510
    %539 = vmatprep.subr.mxu0 0.0
    %540 = vmatpush1.msra.mxu0 0.0
    %541 = vmatprep.subr.mxu0 0.0
    %542 = vmatpush1.msra.mxu0 0.0
    %543 = vmatprep.subr.mxu0 0.0
    %544 = vmatpush1.msra.mxu0 0.0
    %545 = vmatprep.subr.mxu0 0.0
    %546 = vmatpush1.msra.mxu0 0.0
    %547 = vmatprep.subr.mxu0 0.0
    %548 = vmatpush1.msra.mxu0 0.0
    %549 = vmatprep.subr.mxu0 0.0
    %550 = vmatpush1.msra.mxu0 0.0
    %551 = vmatprep.subr.mxu0 0.0
    %552 = vmatpush1.msra.mxu0 0.0
    %553 = vmatprep.subr.mxu0 0.0
    %554 = vmatpush1.msra.mxu0 0.0
    %555 = vmatprep.subr.mxu0 0.0
    %556 = vmatpush1.msra.mxu0 0.0
    %557 = vmatprep.subr.mxu0 0.0
    %558 = vmatpush1.msra.mxu0 0.0
    %559 = vmatprep.subr.mxu0 0.0
    %560 = vmatpush1.msra.mxu0 0.0
    %561 = vmatprep.subr.mxu0 0.0
    %562 = vmatpush1.msra.mxu0 0.0
    %563 = vmatprep.subr.mxu0 0.0
    %564 = vmatpush1.msra.mxu0 0.0
    %565 = vmatprep.subr.mxu0 0.0
    %566 = vmatpush1.msra.mxu0 0.0
    %567 = vmatprep.subr.mxu0 0.0
    %568 = vmatpush1.msra.mxu0 0.0
    %569 = vmatprep.subr.mxu0 0.0
    %570 = vmatpush1.msra.mxu0 0.0
    %571 = vmatprep.subr.mxu0 0.0
    %572 = vmatpush1.msra.mxu0 0.0
    %573 = vmatprep.subr.mxu0 0.0
    %574 = vmatpush1.msra.mxu0 0.0
    %575 = vmatprep.subr.mxu0 0.0
    %576 = vmatpush1.msra.mxu0 0.0
    %577 = vmatprep.subr.mxu0 0.0
    %578 = vmatpush1.msra.mxu0 0.0
    %579 = vmatprep.subr.mxu0 0.0
    %580 = vmatpush1.msra.mxu0 0.0
    %581 = vmatprep.subr.mxu0 0.0
    %582 = vmatpush1.msra.mxu0 0.0
    %583 = vmatprep.subr.mxu0 0.0
    %584 = vmatpush1.msra.mxu0 0.0
    %585 = vmatprep.subr.mxu0 0.0
    %586 = vmatpush1.msra.mxu0 0.0
    %587 = vmatprep.mubr.f32.mxu0 0.0
    %588 = vmatmul.mubr.f32.gmra.mrb[0].mxu0 %v521
    %v589 = vpop.f32.mrb[0].mxu0
    %v590 = vadd.f32 %v517, %v589
    %v591 = vpop.f32.mrb[0].mxu0
    %v592 = vadd.f32 %v517, %v591
    %593 = vdwg.mxu0
    %594 = vst [vmem:[#allocation2] sm:$0xff] %v590
    %595 = vst [vmem:[#allocation2 + $0x8] sm:$0xff] %v592
    // Predicated region
    $region30: #{tpu_custom_call.1} parent=1 // pred_check
      _
    $region31: #{tpu_custom_call.1} parent=1 // pred_check_branch
      %597 = sbr.rel (0) target = $region33
    $region32: #{tpu_custom_call.1} parent=1 // pred_region
      %s599 = ssub.s32 256, 256
      %600 = vsyncadd [#allocation3], %s599
      %s602 = sshll.u32 [#allocation2], 4
      %s603 = int_to_ptr.vmem [resolvable:$true] %s602
      %605 = dma.vmem_to_hbm [thread:$0]  %s603, 256, %s7, [#allocation3]
    $region33: #{tpu_custom_call.1} parent=1 // pred_fallthru
      _
    // Predicated region
    $region34: #{tpu_custom_call.1} parent=1 // pred_check
      _
    $region35: #{tpu_custom_call.1} parent=1 // pred_check_branch
      %607 = sbr.rel (0) target = $region37
    $region36: #{tpu_custom_call.1} parent=1 // pred_region
      %608 = dma.done [#allocation3], 256
    $region37: #{tpu_custom_call.1} parent=1 // pred_fallthru
      _
    %609 = vsyncpa [#allocation3], 1

</llo_original>
